<compile_context>
chip_gen: v5e
topology: v5e:2x2
jax: 0.10.0
libtpu: 0.0.40
codegen_flags: <defaults>
</compile_context>

<pallas_src>
import functools
import math

import jax
import jax.numpy as jnp
from jax import lax
from jax.experimental import pallas as pl
from jax.experimental.pallas import tpu as pltpu


def _cdiv(a, b):
    return -(-a // b)


def _round_up(n, m):
    return ((n + m - 1) // m) * m


def _make_kernel(slope, chunk, n_backbone):
    """Kernel over one [tile, Cin] row block; writes a lane-dense [4, tile] block."""

    def kernel(x_ref, w0_ref, b0_ref, w_ref, b_ref, o_ref):
        tile = x_ref.shape[0]
        n_chunks = tile // chunk                      # static Python int

        def leaky(v):                                 # f32 VPU; max + mul
            return jnp.maximum(v, slope * v)

        def mm(w, h):                                 # bf16/f32 MXU, f32 accumulate
            return jnp.dot(w, h.astype(w.dtype), preferred_element_type=jnp.float32)

        w0 = w0_ref[...]                              # [hid, Cin], tiny, loop-invariant
        b0 = b0_ref[...]                              # [hid, 1] f32

        def body(c, carry):
            start = pl.multiple_of(c * chunk, chunk)
            xc = x_ref[pl.ds(start, chunk), :]        # [chunk, Cin] natural layout
            # First layer folds the layout swap: contract the Cin (lane) dim of
            # xc against w0's input dim -> feature-major [hid, chunk].
            h = lax.dot_general(
                w0, xc.astype(w0.dtype),
                dimension_numbers=(((1,), (1,)), ((), ())),
                preferred_element_type=jnp.float32)
            h = leaky(h + b0)

            for l in range(n_backbone):               # unrolled tiny layer loop
                h = leaky(mm(w_ref[l], h) + b_ref[l])

            # Fused head: row 0 = alpha (linear), rows 1:1+hid//2 = rgb hidden.
            z = mm(w_ref[n_backbone], h) + b_ref[n_backbone]
            alpha = z[0:1, :]
            za = leaky(z)       # leaky(alpha) row hits a zero weight column below

            out2 = mm(w_ref[n_backbone + 1], za) + b_ref[n_backbone + 1]

            # cat([alpha, rgb], channel) via direct sublane-slice stores.
            o_ref[0:1, pl.ds(start, chunk)] = alpha.astype(o_ref.dtype)
            o_ref[1:4, pl.ds(start, chunk)] = out2[0:3, :].astype(o_ref.dtype)
            return carry

        lax.fori_loop(0, n_chunks, body, 0)

    return kernel


def init_params(key, mlp, hidden, in_dim):
    """PyTorch-style uniform init. Returns list of (w, b); w is (fan_in, fan_out)."""
    dims = ([(in_dim, hidden)] + [(hidden, hidden)] * mlp
            + [(hidden, 1), (hidden, hidden // 2), (hidden // 2, 3)])
    keys = jax.random.split(key, len(dims))
    params = []
    for k, (fi, fo) in zip(keys, dims):
        kw, kb = jax.random.split(k)
        bound = 1.0 / math.sqrt(fi)
        w = jax.random.uniform(kw, (fi, fo), jnp.float32, -bound, bound)
        b = jax.random.uniform(kb, (fo,), jnp.float32, -bound, bound)
        params.append((w, b))
    return params


def pack_params(params, *, dtype=jnp.bfloat16):
    """Pack layers (host-side, once).

    Returns:
      w0     [hidden, in_dim]          first layer weights (transposed), `dtype`
      b0     [hidden, 1]               first layer bias, f32
      w_slab [mlp+2, hidden, hidden]   remaining layers (transposed), `dtype`
      b_slab [mlp+2, hidden, 1]        biases, f32
    Slab layout: [0:mlp) = backbone, [mlp] = fused alpha+rgb1 head,
    [mlp+1] = rgb2 packed with a ZERO alpha column.
    """
    mlp = len(params) - 4
    w_in, b_in = params[0]
    in_dim, hidden = w_in.shape
    hh = hidden // 2
    assert hidden >= max(4, 1 + hh), "hidden too small to pack the fused head"
    L2 = mlp + 2

    w0 = w_in.T.astype(dtype)
    b0 = b_in.reshape(hidden, 1).astype(jnp.float32)

    w_slab = jnp.zeros((L2, hidden, hidden), jnp.float32)
    b_slab = jnp.zeros((L2, hidden, 1), jnp.float32)

    for l in range(mlp):
        w, b = params[1 + l]
        w_slab = w_slab.at[l].set(w.T)
        b_slab = b_slab.at[l, :, 0].set(b)

    wa, ba = params[mlp + 1]   # alpha head   (hidden, 1)
    w1, b1 = params[mlp + 2]   # rgb layer 1  (hidden, hidden//2)
    w2, b2 = params[mlp + 3]   # rgb layer 2  (hidden//2, 3)

    # Fused head: row 0 = alpha, rows 1:1+hh = rgb hidden.
    w_slab = w_slab.at[mlp, 0, :].set(wa[:, 0])
    b_slab = b_slab.at[mlp, 0, 0].set(ba[0])
    w_slab = w_slab.at[mlp, 1:1 + hh, :].set(w1.T)
    b_slab = b_slab.at[mlp, 1:1 + hh, 0].set(b1)

    # rgb layer 2: output rows 0:3; input columns shifted by 1 so the
    # (activated) alpha row contributes nothing.
    w_slab = w_slab.at[mlp + 1, 0:3, 1:1 + hh].set(w2.T)
    b_slab = b_slab.at[mlp + 1, 0:3, 0].set(b2)

    # Guard the fused-head invariant: alpha column of rgb2 must stay zero.
    assert float(jnp.max(jnp.abs(w_slab[mlp + 1, :, 0]))) == 0.0, \
        "packed second RGB layer must have a zero alpha column"

    return w0, b0, w_slab.astype(dtype), b_slab


def vanilla_mlp_rgba(x, w0, b0, w_slab, b_slab, *, lrelu_slope,
                     tile_n=2048, chunk=256):
    """x: [B, H, W, Cin] -> [B, H, W, 4] (alpha, r, g, b)."""
    B, H, W, Cin = x.shape
    N = B * H * W
    L2, hid, _ = w_slab.shape
    n_backbone = L2 - 2

    chunk = max(128, _round_up(chunk, 128))
    # Big DMA tile (amortize ~0.35us/step), multiple of `chunk`, even grid-step
    # count when possible (v7x dual-TC split), minimal padded-row waste.
    tile = min(_round_up(tile_n, chunk), _round_up(max(N, 1), chunk))
    steps = _cdiv(N, tile)
    if steps > 1 and steps % 2 == 1:
        steps += 1
    tile = _round_up(_cdiv(N, steps), chunk)
    steps = _cdiv(N, tile)
    n_rows = steps * tile

    x2 = x.reshape(N, Cin)                 # metadata-only reshape; no HBM pass
    if n_rows != N:
        x2 = jnp.pad(x2, ((0, n_rows - N), (0, 0)))

    flops = 2 * N * (Cin * hid + (n_backbone + 2) * hid * hid)
    bytes_accessed = (
        x.dtype.itemsize * n_rows * (Cin + 4)
        + w0.size * w0.dtype.itemsize
        + w_slab.size * w_slab.dtype.itemsize
        + 4 * (b0.size + b_slab.size))

    kernel = _make_kernel(lrelu_slope, chunk, n_backbone)

    out_t = pl.pallas_call(
        kernel,
        out_shape=jax.ShapeDtypeStruct((4, n_rows), x.dtype),
        grid_spec=pltpu.PrefetchScalarGridSpec(
            num_scalar_prefetch=0,
            grid=(steps,),
            in_specs=[
                pl.BlockSpec((tile, Cin), lambda i: (i, 0)),        # x (natural)
                pl.BlockSpec((hid, Cin), lambda i: (0, 0)),         # w0
                pl.BlockSpec((hid, 1), lambda i: (0, 0)),           # b0
                pl.BlockSpec((L2, hid, hid), lambda i: (0, 0, 0)),  # w slab
                pl.BlockSpec((L2, hid, 1), lambda i: (0, 0, 0)),    # b slab
            ],
            out_specs=pl.BlockSpec((4, tile), lambda i: (0, i)),
        ),
        compiler_params=pltpu.CompilerParams(
            dimension_semantics=("parallel",),
        ),
        cost_estimate=pl.CostEstimate(
            flops=flops, transcendentals=0, bytes_accessed=bytes_accessed),
    )(x2, w0, b0, w_slab, b_slab)

    # Tiny [4, N] transpose back to the module's channel-last layout.
    return out_t[:, :N].T.reshape(B, H, W, 4)


def _reference(x, params, *, mlp, lrelu_slope):
    """Pure-JAX reference mirroring the PyTorch forward."""
    def leaky(v):
        return jnp.where(v > 0, v, lrelu_slope * v)

    h = x
    for l in range(mlp + 1):
        w, b = params[l]
        h = leaky(h @ w + b)
    wa, ba = params[mlp + 1]
    alpha = h @ wa + ba
    w1, b1 = params[mlp + 2]
    r = leaky(h @ w1 + b1)
    w2, b2 = params[mlp + 3]
    rgb = r @ w2 + b2
    return jnp.concatenate([alpha, rgb], axis=-1)


if __name__ == "__main__":
    # Module config (matches VanillaMLPRgba defaults at small scale).
    mlp = 2
    hidden = 32
    pos_level = 4
    depth_level = 4
    lrelu_slope = 0.01
    in_dim = pos_level * 2 * 2 + depth_level * 2   # 24

    key = jax.random.PRNGKey(0)
    kx, kp = jax.random.split(key)

    # N = 2*36*36 = 2592 rows -> 2 grid steps (even, v7x-friendly) x 6 chunks.
    B, H, W = 2, 36, 36
    x = jax.random.normal(kx, (B, H, W, in_dim), jnp.float32)

    params = init_params(kp, mlp, hidden, in_dim)
    ref = _reference(x, params, mlp=mlp, lrelu_slope=lrelu_slope)

    fn = jax.jit(functools.partial(vanilla_mlp_rgba, lrelu_slope=lrelu_slope))

    # 1) Exact-semantics path (f32 weights/operands) — tight check.
    packed_f32 = pack_params(params, dtype=jnp.float32)
    out_f32 = jax.block_until_ready(fn(x, *packed_f32))
    assert out_f32.shape == (B, H, W, 4)
    assert jnp.allclose(out_f32, ref, atol=1e-4, rtol=1e-4), "f32 path mismatch"

    # 2) Default perf path (bf16 MXU operands, f32 accumulate/elementwise).
    packed_bf16 = pack_params(params)              # dtype=jnp.bfloat16 default
    out_bf16 = jax.block_until_ready(fn(x, *packed_bf16))
    assert out_bf16.shape == (B, H, W, 4)
    err = float(jnp.max(jnp.abs(out_bf16 - ref)))
    assert err < 5e-2, f"bf16 path error too large: {err}"

    print("KERNEL_OK")
</pallas_src>

<mosaic_0001>
module attributes {stable_mosaic.version = 11 : i64} {
  func.func @kernel(%arg0: i32, %arg1: memref<1536x24xf32, #tpu.memory_space<vmem>>, %arg2: memref<32x24xf32, #tpu.memory_space<vmem>>, %arg3: memref<32x1xf32, #tpu.memory_space<vmem>>, %arg4: memref<4x32x32xf32, #tpu.memory_space<vmem>>, %arg5: memref<4x32x1xf32, #tpu.memory_space<vmem>>, %arg6: memref<4x1536xf32, #tpu.memory_space<vmem>>) attributes {dimension_semantics = [#tpu.dimension_semantics<parallel>], iteration_bounds = array<i64: 2>, scalar_prefetch = 0 : i64, scratch_operands = 0 : i64, tpu.core_type = #tpu.core_type<tc>, window_params = [{transform_indices = @transform_0, window_bounds = array<i64: 1536, 24>}, {pipeline_mode = #tpu.pipeline_mode<synchronous>, transform_indices = @transform_1, window_bounds = array<i64: 32, 24>}, {pipeline_mode = #tpu.pipeline_mode<synchronous>, transform_indices = @transform_2, window_bounds = array<i64: 32, 1>}, {pipeline_mode = #tpu.pipeline_mode<synchronous>, transform_indices = @transform_3, window_bounds = array<i64: 4, 32, 32>}, {pipeline_mode = #tpu.pipeline_mode<synchronous>, transform_indices = @transform_4, window_bounds = array<i64: 4, 32, 1>}, {transform_indices = @transform_5, window_bounds = array<i64: 4, 1536>}]} {
    %c0 = arith.constant 0 : index
    %c0_0 = arith.constant 0 : index
    %0 = vector.load %arg2[%c0, %c0_0] : memref<32x24xf32, #tpu.memory_space<vmem>>, vector<32x24xf32>
    %c0_1 = arith.constant 0 : index
    %c0_2 = arith.constant 0 : index
    %1 = vector.load %arg3[%c0_1, %c0_2] : memref<32x1xf32, #tpu.memory_space<vmem>>, vector<32x1xf32>
    %c0_i32 = arith.constant 0 : i32
    %c6_i32 = arith.constant 6 : i32
    %2 = arith.addi %c0_i32, %c6_i32 : i32
    %c1_i32 = arith.constant 1 : i32
    scf.for %arg7 = %c0_i32 to %2 step %c1_i32  : i32 {
      %c256_i32 = arith.constant 256 : i32
      %3 = arith.muli %arg7, %c256_i32 : i32
      %4 = tpu.assume_multiple %3, 256 : i32
      %5 = arith.index_cast %4 : i32 to index
      %c0_4 = arith.constant 0 : index
      %6 = vector.load %arg1[%5, %c0_4] : memref<1536x24xf32, #tpu.memory_space<vmem>>, vector<256x24xf32>
      %cst = arith.constant dense<0.000000e+00> : vector<32x256xf32>
      %7 = tpu.matmul %0, %6, %cst {dimension_numbers = #tpu.dot_dimension_numbers<[1], [1], [0], [0], [0, 0, 1, 0], [], []>} : vector<32x24xf32>, vector<256x24xf32>, vector<32x256xf32> -> vector<32x256xf32>
      %8 = vector.broadcast %1 : vector<32x1xf32> to vector<32x256xf32>
      %9 = arith.addf %7, %8 : vector<32x256xf32>
      %cst_5 = arith.constant 0.00999999977 : f32
      %10 = vector.broadcast %cst_5 : f32 to vector<32x256xf32>
      %11 = arith.mulf %10, %9 : vector<32x256xf32>
      %12 = arith.maximumf %9, %11 : vector<32x256xf32>
      %c0_6 = arith.constant 0 : index
      %c0_7 = arith.constant 0 : index
      %c0_8 = arith.constant 0 : index
      %13 = vector.load %arg4[%c0_6, %c0_7, %c0_8] : memref<4x32x32xf32, #tpu.memory_space<vmem>>, vector<1x32x32xf32>
      %14 = vector.shape_cast %13 : vector<1x32x32xf32> to vector<32x32xf32>
      %cst_9 = arith.constant dense<0.000000e+00> : vector<32x256xf32>
      %15 = tpu.matmul %14, %12, %cst_9 {dimension_numbers = #tpu.dot_dimension_numbers<[1], [0], [0], [1], [0, 0, 1, 1], [], []>} : vector<32x32xf32>, vector<32x256xf32>, vector<32x256xf32> -> vector<32x256xf32>
      %c0_10 = arith.constant 0 : index
      %c0_11 = arith.constant 0 : index
      %c0_12 = arith.constant 0 : index
      %16 = vector.load %arg5[%c0_10, %c0_11, %c0_12] : memref<4x32x1xf32, #tpu.memory_space<vmem>>, vector<1x32x1xf32>
      %17 = vector.shape_cast %16 : vector<1x32x1xf32> to vector<32x1xf32>
      %18 = vector.broadcast %17 : vector<32x1xf32> to vector<32x256xf32>
      %19 = arith.addf %15, %18 : vector<32x256xf32>
      %cst_13 = arith.constant 0.00999999977 : f32
      %20 = vector.broadcast %cst_13 : f32 to vector<32x256xf32>
      %21 = arith.mulf %20, %19 : vector<32x256xf32>
      %22 = arith.maximumf %19, %21 : vector<32x256xf32>
      %c1 = arith.constant 1 : index
      %c0_14 = arith.constant 0 : index
      %c0_15 = arith.constant 0 : index
      %23 = vector.load %arg4[%c1, %c0_14, %c0_15] : memref<4x32x32xf32, #tpu.memory_space<vmem>>, vector<1x32x32xf32>
      %24 = vector.shape_cast %23 : vector<1x32x32xf32> to vector<32x32xf32>
      %cst_16 = arith.constant dense<0.000000e+00> : vector<32x256xf32>
      %25 = tpu.matmul %24, %22, %cst_16 {dimension_numbers = #tpu.dot_dimension_numbers<[1], [0], [0], [1], [0, 0, 1, 1], [], []>} : vector<32x32xf32>, vector<32x256xf32>, vector<32x256xf32> -> vector<32x256xf32>
      %c1_17 = arith.constant 1 : index
      %c0_18 = arith.constant 0 : index
      %c0_19 = arith.constant 0 : index
      %26 = vector.load %arg5[%c1_17, %c0_18, %c0_19] : memref<4x32x1xf32, #tpu.memory_space<vmem>>, vector<1x32x1xf32>
      %27 = vector.shape_cast %26 : vector<1x32x1xf32> to vector<32x1xf32>
      %28 = vector.broadcast %27 : vector<32x1xf32> to vector<32x256xf32>
      %29 = arith.addf %25, %28 : vector<32x256xf32>
      %cst_20 = arith.constant 0.00999999977 : f32
      %30 = vector.broadcast %cst_20 : f32 to vector<32x256xf32>
      %31 = arith.mulf %30, %29 : vector<32x256xf32>
      %32 = arith.maximumf %29, %31 : vector<32x256xf32>
      %c2 = arith.constant 2 : index
      %c0_21 = arith.constant 0 : index
      %c0_22 = arith.constant 0 : index
      %33 = vector.load %arg4[%c2, %c0_21, %c0_22] : memref<4x32x32xf32, #tpu.memory_space<vmem>>, vector<1x32x32xf32>
      %34 = vector.shape_cast %33 : vector<1x32x32xf32> to vector<32x32xf32>
      %cst_23 = arith.constant dense<0.000000e+00> : vector<32x256xf32>
      %35 = tpu.matmul %34, %32, %cst_23 {dimension_numbers = #tpu.dot_dimension_numbers<[1], [0], [0], [1], [0, 0, 1, 1], [], []>} : vector<32x32xf32>, vector<32x256xf32>, vector<32x256xf32> -> vector<32x256xf32>
      %c2_24 = arith.constant 2 : index
      %c0_25 = arith.constant 0 : index
      %c0_26 = arith.constant 0 : index
      %36 = vector.load %arg5[%c2_24, %c0_25, %c0_26] : memref<4x32x1xf32, #tpu.memory_space<vmem>>, vector<1x32x1xf32>
      %37 = vector.shape_cast %36 : vector<1x32x1xf32> to vector<32x1xf32>
      %38 = vector.broadcast %37 : vector<32x1xf32> to vector<32x256xf32>
      %39 = arith.addf %35, %38 : vector<32x256xf32>
      %40 = vector.extract_strided_slice %39 {offsets = [0, 0], sizes = [1, 256], strides = [1, 1]} : vector<32x256xf32> to vector<1x256xf32>
      %cst_27 = arith.constant 0.00999999977 : f32
      %41 = vector.broadcast %cst_27 : f32 to vector<32x256xf32>
      %42 = arith.mulf %41, %39 : vector<32x256xf32>
      %43 = arith.maximumf %39, %42 : vector<32x256xf32>
      %c3 = arith.constant 3 : index
      %c0_28 = arith.constant 0 : index
      %c0_29 = arith.constant 0 : index
      %44 = vector.load %arg4[%c3, %c0_28, %c0_29] : memref<4x32x32xf32, #tpu.memory_space<vmem>>, vector<1x32x32xf32>
      %45 = vector.shape_cast %44 : vector<1x32x32xf32> to vector<32x32xf32>
      %cst_30 = arith.constant dense<0.000000e+00> : vector<32x256xf32>
      %46 = tpu.matmul %45, %43, %cst_30 {dimension_numbers = #tpu.dot_dimension_numbers<[1], [0], [0], [1], [0, 0, 1, 1], [], []>} : vector<32x32xf32>, vector<32x256xf32>, vector<32x256xf32> -> vector<32x256xf32>
      %c3_31 = arith.constant 3 : index
      %c0_32 = arith.constant 0 : index
      %c0_33 = arith.constant 0 : index
      %47 = vector.load %arg5[%c3_31, %c0_32, %c0_33] : memref<4x32x1xf32, #tpu.memory_space<vmem>>, vector<1x32x1xf32>
      %48 = vector.shape_cast %47 : vector<1x32x1xf32> to vector<32x1xf32>
      %49 = vector.broadcast %48 : vector<32x1xf32> to vector<32x256xf32>
      %50 = arith.addf %46, %49 : vector<32x256xf32>
      %c0_34 = arith.constant 0 : index
      %51 = arith.index_cast %4 : i32 to index
      %52 = vector.load %arg6[%c0_34, %51] : memref<4x1536xf32, #tpu.memory_space<vmem>>, vector<1x256xf32>
      tpu.vector_store %arg6[%c0_34, %51], %40 {strides = array<i32>} : memref<4x1536xf32, #tpu.memory_space<vmem>>, vector<1x256xf32>,
      %53 = vector.extract_strided_slice %50 {offsets = [0, 0], sizes = [3, 256], strides = [1, 1]} : vector<32x256xf32> to vector<3x256xf32>
      %c1_35 = arith.constant 1 : index
      %54 = arith.index_cast %4 : i32 to index
      %55 = vector.load %arg6[%c1_35, %54] : memref<4x1536xf32, #tpu.memory_space<vmem>>, vector<3x256xf32>
      tpu.vector_store %arg6[%c1_35, %54], %53 {strides = array<i32>} : memref<4x1536xf32, #tpu.memory_space<vmem>>, vector<3x256xf32>,
    }
    %c6_i32_3 = arith.constant 6 : i32
    return
  }
  func.func @transform_0(%arg0: i32) -> (i32, i32) {
    %c0_i32 = arith.constant 0 : i32
    %c0_i32_0 = arith.constant 0 : i32
    return %arg0, %c0_i32 : i32, i32
  }
  func.func @transform_1(%arg0: i32) -> (i32, i32) {
    %c0_i32 = arith.constant 0 : i32
    %c0_i32_0 = arith.constant 0 : i32
    %c0_i32_1 = arith.constant 0 : i32
    return %c0_i32, %c0_i32_0 : i32, i32
  }
  func.func @transform_2(%arg0: i32) -> (i32, i32) {
    %c0_i32 = arith.constant 0 : i32
    %c0_i32_0 = arith.constant 0 : i32
    %c0_i32_1 = arith.constant 0 : i32
    return %c0_i32, %c0_i32_0 : i32, i32
  }
  func.func @transform_3(%arg0: i32) -> (i32, i32, i32) {
    %c0_i32 = arith.constant 0 : i32
    %c0_i32_0 = arith.constant 0 : i32
    %c0_i32_1 = arith.constant 0 : i32
    %c0_i32_2 = arith.constant 0 : i32
    return %c0_i32, %c0_i32_0, %c0_i32_1 : i32, i32, i32
  }
  func.func @transform_4(%arg0: i32) -> (i32, i32, i32) {
    %c0_i32 = arith.constant 0 : i32
    %c0_i32_0 = arith.constant 0 : i32
    %c0_i32_1 = arith.constant 0 : i32
    %c0_i32_2 = arith.constant 0 : i32
    return %c0_i32, %c0_i32_0, %c0_i32_1 : i32, i32, i32
  }
  func.func @transform_5(%arg0: i32) -> (i32, i32) {
    %c0_i32 = arith.constant 0 : i32
    %c0_i32_0 = arith.constant 0 : i32
    return %c0_i32, %arg0 : i32, i32
  }
}

</mosaic_0001>

<llo_original>
// kernel: vanilla_mlp_rgba.1
$region0: #{vanilla_mlp_rgba.1}
  #allocation0 [shape = 'u32[]', space=smem, size = 0x4, offset = 0x4, fixed_abs, tag = 'smem constant byte address 0x4 - core index']
  #allocation1 [shape = 'u32[72,128]{1,0:T(1,128)}', space=vmem, size = 0x9000, scoped, tag = 'internal scratch']
  %s0 = inlined_call_operand.vmem [shape: f32[3072,24], index: 0, kind: input, shape index: {}]
  %s1 = inlined_call_operand.vmem [shape: f32[32,24], index: 1, kind: input, shape index: {}]
  %s2 = inlined_call_operand.vmem [shape: f32[32,1], index: 2, kind: input, shape index: {}]
  %s3 = inlined_call_operand.vmem [shape: f32[4,32,32], index: 3, kind: input, shape index: {}]
  %s4 = inlined_call_operand.vmem [shape: f32[4,32,1], index: 4, kind: input, shape index: {}]
  %s5 = inlined_call_operand.vmem [shape: f32[4,3072], index: 5, kind: output, shape index: {}]
  %s6 = sld [smem:[#allocation0]]
  $region60: #{vanilla_mlp_rgba.1} parent=0
    _
  %s8 = ssub.s32 1, %s6
  %s9 = scalar_select 0, %s8, %s6
  loop: start=0, step=1, limit=4
  $region2: #{vanilla_mlp_rgba.1} parent=0 // loop_pre_header
    _
  $region3: #{vanilla_mlp_rgba.1} parent=0 // loop_header
    %s11 = sphi 0, %s15
    %p12 = scmp.ge.s32.totalorder %s11, 4
    %s21 = sphi 0, %s23
    %s24 = sphi 0, %s21
    %s25 = sphi 0, %s24
    %s41 = sphi 0, %s25
    %s45 = sphi 0, %s45
    %s47 = sphi 0, %s45
    %s48 = sphi 0, %s47
    %s62 = sphi 0, %s48
    %s66 = sphi 0, %s66
    %s68 = sphi 0, %s66
    %s69 = sphi 0, %s68
    %s83 = sphi 0, %s69
    %s87 = sphi 0, %s87
    %s89 = sphi 0, %s87
    %s90 = sphi 0, %s89
    %s104 = sphi 0, %s90
    %s108 = sphi 0, %s108
    %s110 = sphi 0, %s108
    %s111 = sphi 0, %s110
    %s125 = sphi 0, %s111
    %s131 = sphi 0, %s133
    %s134 = sphi 0, %s131
    %s135 = sphi 0, %s134
    %s151 = sphi 0, %s135
  $region4: #{vanilla_mlp_rgba.1} parent=0 // loop_header_branch
    %14 = sbr.rel (%p12) target = $region8
  $region5: #{vanilla_mlp_rgba.1} parent=0 // loop_body
    %s16 = ssub.s32 %s11, 1
    %s17 = ssub.s32 %s11, 2
    %s18 = sadd.s32 %s11, 1
    %s19 = ssub.s32 %s11, %s18
    %p20 = scmp.eq.s32.totalorder %s19, 0
    %s22 = sadd.s32 %s21, 1
    %s23 = scalar_select %p20, %s21, %s22
    %p26 = pneg %p20
    %p27 = scmp.eq.s32.totalorder %s11, 1
    %p28 = por %p26, %p27
    %p29 = scmp.ne.s32.totalorder %s21, %s24
    %p30 = scmp.eq.s32.totalorder %s11, 0
    %p31 = por %p29, %p30
    %p32 = scmp.ne.s32.totalorder %s21, %s24
    %p33 = scmp.eq.s32.totalorder %s16, 1
    %p34 = por %p32, %p33
    %p35 = scmp.ne.s32.totalorder %s24, %s25
    %p36 = scmp.eq.s32.totalorder %s16, 0
    %p37 = por %p35, %p36
    %p38 = scmp.ne.s32.totalorder %s24, %s25
    %p39 = scmp.eq.s32.totalorder %s17, 1
    %p40 = por %p38, %p39
    %p42 = scmp.ne.s32.totalorder %s25, %s41
    %p43 = scmp.eq.s32.totalorder %s17, 0
    %p44 = por %p42, %p43
    %s46 = sadd.s32 %s45, 1
    %p49 = scmp.eq.s32.totalorder %s11, 1
    %p50 = scmp.ne.s32.totalorder %s45, %s47
    %p51 = scmp.eq.s32.totalorder %s11, 0
    %p52 = por %p50, %p51
    %p53 = scmp.ne.s32.totalorder %s45, %s47
    %p54 = scmp.eq.s32.totalorder %s16, 1
    %p55 = por %p53, %p54
    %p56 = scmp.ne.s32.totalorder %s47, %s48
    %p57 = scmp.eq.s32.totalorder %s16, 0
    %p58 = por %p56, %p57
    %p59 = scmp.ne.s32.totalorder %s47, %s48
    %p60 = scmp.eq.s32.totalorder %s17, 1
    %p61 = por %p59, %p60
    %p63 = scmp.ne.s32.totalorder %s48, %s62
    %p64 = scmp.eq.s32.totalorder %s17, 0
    %p65 = por %p63, %p64
    %s67 = sadd.s32 %s66, 1
    %p70 = scmp.eq.s32.totalorder %s11, 1
    %p71 = scmp.ne.s32.totalorder %s66, %s68
    %p72 = scmp.eq.s32.totalorder %s11, 0
    %p73 = por %p71, %p72
    %p74 = scmp.ne.s32.totalorder %s66, %s68
    %p75 = scmp.eq.s32.totalorder %s16, 1
    %p76 = por %p74, %p75
    %p77 = scmp.ne.s32.totalorder %s68, %s69
    %p78 = scmp.eq.s32.totalorder %s16, 0
    %p79 = por %p77, %p78
    %p80 = scmp.ne.s32.totalorder %s68, %s69
    %p81 = scmp.eq.s32.totalorder %s17, 1
    %p82 = por %p80, %p81
    %p84 = scmp.ne.s32.totalorder %s69, %s83
    %p85 = scmp.eq.s32.totalorder %s17, 0
    %p86 = por %p84, %p85
    %s88 = sadd.s32 %s87, 1
    %p91 = scmp.eq.s32.totalorder %s11, 1
    %p92 = scmp.ne.s32.totalorder %s87, %s89
    %p93 = scmp.eq.s32.totalorder %s11, 0
    %p94 = por %p92, %p93
    %p95 = scmp.ne.s32.totalorder %s87, %s89
    %p96 = scmp.eq.s32.totalorder %s16, 1
    %p97 = por %p95, %p96
    %p98 = scmp.ne.s32.totalorder %s89, %s90
    %p99 = scmp.eq.s32.totalorder %s16, 0
    %p100 = por %p98, %p99
    %p101 = scmp.ne.s32.totalorder %s89, %s90
    %p102 = scmp.eq.s32.totalorder %s17, 1
    %p103 = por %p101, %p102
    %p105 = scmp.ne.s32.totalorder %s90, %s104
    %p106 = scmp.eq.s32.totalorder %s17, 0
    %p107 = por %p105, %p106
    %s109 = sadd.s32 %s108, 1
    %p112 = scmp.eq.s32.totalorder %s11, 1
    %p113 = scmp.ne.s32.totalorder %s108, %s110
    %p114 = scmp.eq.s32.totalorder %s11, 0
    %p115 = por %p113, %p114
    %p116 = scmp.ne.s32.totalorder %s108, %s110
    %p117 = scmp.eq.s32.totalorder %s16, 1
    %p118 = por %p116, %p117
    %p119 = scmp.ne.s32.totalorder %s110, %s111
    %p120 = scmp.eq.s32.totalorder %s16, 0
    %p121 = por %p119, %p120
    %p122 = scmp.ne.s32.totalorder %s110, %s111
    %p123 = scmp.eq.s32.totalorder %s17, 1
    %p124 = por %p122, %p123
    %p126 = scmp.ne.s32.totalorder %s111, %s125
    %p127 = scmp.eq.s32.totalorder %s17, 0
    %p128 = por %p126, %p127
    %s129 = ssub.s32 %s11, %s18
    %p130 = scmp.eq.s32.totalorder %s129, 0
    %s132 = sadd.s32 %s131, 1
    %s133 = scalar_select %p130, %s131, %s132
    %p136 = pneg %p130
    %p137 = scmp.eq.s32.totalorder %s11, 1
    %p138 = por %p136, %p137
    %p139 = scmp.ne.s32.totalorder %s131, %s134
    %p140 = scmp.eq.s32.totalorder %s11, 0
    %p141 = por %p139, %p140
    %p142 = scmp.ne.s32.totalorder %s131, %s134
    %p143 = scmp.eq.s32.totalorder %s16, 1
    %p144 = por %p142, %p143
    %p145 = scmp.ne.s32.totalorder %s134, %s135
    %p146 = scmp.eq.s32.totalorder %s16, 0
    %p147 = por %p145, %p146
    %p148 = scmp.ne.s32.totalorder %s134, %s135
    %p149 = scmp.eq.s32.totalorder %s17, 1
    %p150 = por %p148, %p149
    %p152 = scmp.ne.s32.totalorder %s135, %s151
    %p153 = scmp.eq.s32.totalorder %s17, 0
    %p154 = por %p152, %p153
    %p155 = scmp.le.s32.totalorder 1, %s11
    %p156 = scmp.lt.s32.totalorder %s11, 3
    %p157 = pnand %p155, %p156
    %p158 = pneg %p157
    // Predicated region
    $region9: #{vanilla_mlp_rgba.1} parent=5 // pred_check
      _
    $region10: #{vanilla_mlp_rgba.1} parent=5 // pred_check_branch
      %160 = sbr.rel (%p157) target = $region12
    $region11: #{vanilla_mlp_rgba.1} parent=5 // pred_region
      %s161 = ssub.s32 %s11, 1
      // Predicated region
      $region13: #{vanilla_mlp_rgba.1} parent=11 // pred_check
        %p162 = pneg %p58
      $region14: #{vanilla_mlp_rgba.1} parent=11 // pred_check_branch
        %164 = sbr.rel (%p162) target = $region16
      $region15: #{vanilla_mlp_rgba.1} parent=11 // pred_region
        _
      $region16: #{vanilla_mlp_rgba.1} parent=11 // pred_fallthru
        _
      // Predicated region
      $region17: #{vanilla_mlp_rgba.1} parent=11 // pred_check
        %p165 = pneg %p79
      $region18: #{vanilla_mlp_rgba.1} parent=11 // pred_check_branch
        %167 = sbr.rel (%p165) target = $region20
      $region19: #{vanilla_mlp_rgba.1} parent=11 // pred_region
        _
      $region20: #{vanilla_mlp_rgba.1} parent=11 // pred_fallthru
        _
      // Predicated region
      $region21: #{vanilla_mlp_rgba.1} parent=11 // pred_check
        %p168 = pneg %p100
      $region22: #{vanilla_mlp_rgba.1} parent=11 // pred_check_branch
        %170 = sbr.rel (%p168) target = $region24
      $region23: #{vanilla_mlp_rgba.1} parent=11 // pred_region
        _
      $region24: #{vanilla_mlp_rgba.1} parent=11 // pred_fallthru
        _
      // Predicated region
      $region25: #{vanilla_mlp_rgba.1} parent=11 // pred_check
        %p171 = pneg %p121
      $region26: #{vanilla_mlp_rgba.1} parent=11 // pred_check_branch
        %173 = sbr.rel (%p171) target = $region28
      $region27: #{vanilla_mlp_rgba.1} parent=11 // pred_region
        _
      $region28: #{vanilla_mlp_rgba.1} parent=11 // pred_fallthru
        _
    $region12: #{vanilla_mlp_rgba.1} parent=5 // pred_fallthru
      _
    %p174 = scmp.lt.s32.totalorder %s11, 2
    // Predicated region
    $region29: #{vanilla_mlp_rgba.1} parent=5 // pred_check
      %p175 = pneg %p174
    $region30: #{vanilla_mlp_rgba.1} parent=5 // pred_check_branch
      %177 = sbr.rel (%p175) target = $region32
    $region31: #{vanilla_mlp_rgba.1} parent=5 // pred_region
      // Predicated region
      $region33: #{vanilla_mlp_rgba.1} parent=31 // pred_check
        %p178 = pneg %p31
      $region34: #{vanilla_mlp_rgba.1} parent=31 // pred_check_branch
        %180 = sbr.rel (%p178) target = $region36
      $region35: #{vanilla_mlp_rgba.1} parent=31 // pred_region
        %s181 = smul.u32 192, %s11
        %p182 = scmp.lt.s32.totalorder %s181, 383
        %s183 = scalar_select %p182, %s181, 383
        %s184 = smul.addr %s183, 8
        %s185 = scalar_lea.vmem %s0, %s184
        %s186 = smul.u32 192, %s11
      $region36: #{vanilla_mlp_rgba.1} parent=31 // pred_fallthru
        _
    $region32: #{vanilla_mlp_rgba.1} parent=5 // pred_fallthru
      _
    %p187 = scmp.le.s32.totalorder 1, %s11
    %p188 = scmp.lt.s32.totalorder %s11, 3
    %p189 = pnand %p187, %p188
    %p190 = pneg %p189
    // Predicated region
    $region37: #{vanilla_mlp_rgba.1} parent=5 // pred_check
      _
    $region38: #{vanilla_mlp_rgba.1} parent=5 // pred_check_branch
      %192 = sbr.rel (%p189) target = $region40
    $region39: #{vanilla_mlp_rgba.1} parent=5 // pred_region
      %s193 = ssub.s32 %s11, 1
      %s194 = smul.u32 192, %s16
      %p195 = scmp.lt.s32.totalorder %s194, 383
      %s196 = scalar_select %p195, %s194, 383
      %s197 = smul.addr %s196, 8
      %s198 = scalar_lea.vmem %s0, %s197
      %p199 = pneg %p37
      %p200 = pneg %p34
      %p201 = pneg %p58
      %p202 = pneg %p55
      %p203 = pneg %p79
      %p204 = pneg %p76
      %p205 = pneg %p100
      %p206 = pneg %p97
      %p207 = pneg %p121
      %p208 = pneg %p118
      %p209 = pneg %p147
      %p210 = pneg %p144
      %s211 = smul.u32 12, %s16
      %p212 = scmp.lt.s32.totalorder %s211, 23
      %s213 = scalar_select %p212, %s211, 23
      %s214 = smul.addr %s213, 4
      %s215 = scalar_lea.vmem %s5, %s214
      %s216 = smul.u32 192, %s16
      %p217 = scmp.lt.s32.totalorder %s216, 383
      %s218 = scalar_select %p217, %s216, 383
      %s219 = smul.addr %s218, 8
      %s220 = scalar_lea.vmem %s0, %s219
      %s221 = smul.u32 192, %s16
      %s222 = smul.u32 12, %s16
      %p223 = scmp.lt.s32.totalorder %s222, 23
      %s224 = scalar_select %p223, %s222, 23
      %s225 = smul.addr %s224, 4
      %s226 = scalar_lea.vmem %s5, %s225
      %s227 = smul.u32 12, %s16
      %v228 = vld [vmem:[%s1] sm:$0xff]
      %v229 = vld [vmem:[%s1 + $0x8] sm:$0xff]
      %v230 = vld [vmem:[%s1 + $0x10] sm:$0xff]
      %v231 = vld [vmem:[%s1 + $0x18] sm:$0xff]
      %v232 = vld [vmem:[%s2] sm:$0xff]
      %v233 = vld [vmem:[%s2 + $0x8] sm:$0xff]
      %v234 = vld [vmem:[%s2 + $0x10] sm:$0xff]
      %v235 = vld [vmem:[%s2 + $0x18] sm:$0xff]
      loop: start=0, step=1, limit=6
      $region41: #{vanilla_mlp_rgba.1} parent=39 // loop_pre_header
        _
      $region42: #{vanilla_mlp_rgba.1} parent=39 // loop_header
        %s237 = sphi 0, %s241
        %p238 = scmp.ge.s32.totalorder %s237, 6
      $region43: #{vanilla_mlp_rgba.1} parent=39 // loop_header_branch
        %240 = sbr.rel (%p238) target = $region47
      $region44: #{vanilla_mlp_rgba.1} parent=39 // loop_body
        %s242 = smul.u32 %s237, 256
        %s243 = scalar_lea.vmem %s220, %s242
        %v244 = vld [vmem:[%s243] sm:$0xff]
        %v245 = vld [vmem:[%s243 + $0x8] sm:$0xff]
        %v246 = vld [vmem:[%s243 + $0x10] sm:$0xff]
        %v247 = vld [vmem:[%s243 + $0x18] sm:$0xff]
        %v248 = vld [vmem:[%s243 + $0x20] sm:$0xff]
        %v249 = vld [vmem:[%s243 + $0x28] sm:$0xff]
        %v250 = vld [vmem:[%s243 + $0x30] sm:$0xff]
        %v251 = vld [vmem:[%s243 + $0x38] sm:$0xff]
        %v252 = vld [vmem:[%s243 + $0x40] sm:$0xff]
        %v253 = vld [vmem:[%s243 + $0x48] sm:$0xff]
        %v254 = vld [vmem:[%s243 + $0x50] sm:$0xff]
        %v255 = vld [vmem:[%s243 + $0x58] sm:$0xff]
        %v256 = vld [vmem:[%s243 + $0x60] sm:$0xff]
        %v257 = vld [vmem:[%s243 + $0x68] sm:$0xff]
        %v258 = vld [vmem:[%s243 + $0x70] sm:$0xff]
        %v259 = vld [vmem:[%s243 + $0x78] sm:$0xff]
        %v260 = vld [vmem:[%s243 + $0x80] sm:$0xff]
        %v261 = vld [vmem:[%s243 + $0x88] sm:$0xff]
        %v262 = vld [vmem:[%s243 + $0x90] sm:$0xff]
        %v263 = vld [vmem:[%s243 + $0x98] sm:$0xff]
        %v264 = vld [vmem:[%s243 + $0xa0] sm:$0xff]
        %v265 = vld [vmem:[%s243 + $0xa8] sm:$0xff]
        %v266 = vld [vmem:[%s243 + $0xb0] sm:$0xff]
        %v267 = vld [vmem:[%s243 + $0xb8] sm:$0xff]
        %v268 = vld [vmem:[%s243 + $0xc0] sm:$0xff]
        %v269 = vld [vmem:[%s243 + $0xc8] sm:$0xff]
        %v270 = vld [vmem:[%s243 + $0xd0] sm:$0xff]
        %v271 = vld [vmem:[%s243 + $0xd8] sm:$0xff]
        %v272 = vld [vmem:[%s243 + $0xe0] sm:$0xff]
        %v273 = vld [vmem:[%s243 + $0xe8] sm:$0xff]
        %v274 = vld [vmem:[%s243 + $0xf0] sm:$0xff]
        %v275 = vld [vmem:[%s243 + $0xf8] sm:$0xff]
        %277 = vset.pattern.permute.xlu0 0
        %278 = vperm.xlu0 %277, %v232
        %v279 = vpop.permute.xlu0 %278
        %282 = vset.pattern.permute.xlu0 0
        %283 = vperm.xlu0 %282, %v233
        %v284 = vpop.permute.xlu0 %283
        %287 = vset.pattern.permute.xlu0 0
        %288 = vperm.xlu0 %287, %v234
        %v289 = vpop.permute.xlu0 %288
        %292 = vset.pattern.permute.xlu0 0
        %293 = vperm.xlu0 %292, %v235
        %v294 = vpop.permute.xlu0 %293
        %vm296 = vcmask 195584
        %v298 = vsel %vm296, %v228, 0
        %v301 = vsel %vm296, %v229, 0
        %v304 = vsel %vm296, %v230, 0
        %v307 = vsel %vm296, %v231, 0
        %v310 = vsel %vm296, %v244, 0
        %v313 = vsel %vm296, %v245, 0
        %v316 = vsel %vm296, %v246, 0
        %v319 = vsel %vm296, %v247, 0
        %v322 = vsel %vm296, %v248, 0
        %v325 = vsel %vm296, %v249, 0
        %v328 = vsel %vm296, %v250, 0
        %v331 = vsel %vm296, %v251, 0
        %v334 = vsel %vm296, %v252, 0
        %v337 = vsel %vm296, %v253, 0
        %v340 = vsel %vm296, %v254, 0
        %v343 = vsel %vm296, %v255, 0
        %v346 = vsel %vm296, %v256, 0
        %v349 = vsel %vm296, %v257, 0
        %v352 = vsel %vm296, %v258, 0
        %v355 = vsel %vm296, %v259, 0
        %v358 = vsel %vm296, %v260, 0
        %v361 = vsel %vm296, %v261, 0
        %v364 = vsel %vm296, %v262, 0
        %v367 = vsel %vm296, %v263, 0
        %v370 = vsel %vm296, %v264, 0
        %v373 = vsel %vm296, %v265, 0
        %v376 = vsel %vm296, %v266, 0
        %v379 = vsel %vm296, %v267, 0
        %v382 = vsel %vm296, %v268, 0
        %v385 = vsel %vm296, %v269, 0
        %v388 = vsel %vm296, %v270, 0
        %v391 = vsel %vm296, %v271, 0
        %v394 = vsel %vm296, %v272, 0
        %v397 = vsel %vm296, %v273, 0
        %v400 = vsel %vm296, %v274, 0
        %v403 = vsel %vm296, %v275, 0
        %405 = vmatpush.xpose.msra.mxu0 %v355
        %406 = vmatpush.xpose.msra.mxu0 %v352
        %407 = vmatpush.xpose.msra.mxu0 %v349
        %408 = vmatpush.xpose.msra.mxu0 %v346
        %409 = vmatpush.xpose.msra.mxu0 %v343
        %410 = vmatpush.xpose.msra.mxu0 %v340
        %411 = vmatpush.xpose.msra.mxu0 %v337
        %412 = vmatpush.xpose.msra.mxu0 %v334
        %413 = vmatpush.xpose.msra.mxu0 %v331
        %414 = vmatpush.xpose.msra.mxu0 %v328
        %415 = vmatpush.xpose.msra.mxu0 %v325
        %416 = vmatpush.xpose.msra.mxu0 %v322
        %417 = vmatpush.xpose.msra.mxu0 %v319
        %418 = vmatpush.xpose.msra.mxu0 %v316
        %419 = vmatpush.xpose.msra.mxu0 %v313
        %420 = vmatpush.xpose.msra.mxu0 %v310
        %421 = vmatmul.f32.gmra.mxu0 %v298
        %v422 = vpop.f32.mrf.mxu0
        %v423 = vadd.f32 %v279, %v422
        %424 = vmatmul.f32.gmra.mxu0 %v301
        %v425 = vpop.f32.mrf.mxu0
        %v426 = vadd.f32 %v284, %v425
        %427 = vmatmul.f32.gmra.mxu0 %v304
        %v428 = vpop.f32.mrf.mxu0
        %v429 = vadd.f32 %v289, %v428
        %430 = vmatmul.f32.gmra.mxu0 %v307
        %v431 = vpop.f32.mrf.mxu0
        %v432 = vadd.f32 %v294, %v431
        %433 = vdwg.mxu0
        %434 = vmatpush.xpose.msra.mxu0 %v403
        %435 = vmatpush.xpose.msra.mxu0 %v400
        %436 = vmatpush.xpose.msra.mxu0 %v397
        %437 = vmatpush.xpose.msra.mxu0 %v394
        %438 = vmatpush.xpose.msra.mxu0 %v391
        %439 = vmatpush.xpose.msra.mxu0 %v388
        %440 = vmatpush.xpose.msra.mxu0 %v385
        %441 = vmatpush.xpose.msra.mxu0 %v382
        %442 = vmatpush.xpose.msra.mxu0 %v379
        %443 = vmatpush.xpose.msra.mxu0 %v376
        %444 = vmatpush.xpose.msra.mxu0 %v373
        %445 = vmatpush.xpose.msra.mxu0 %v370
        %446 = vmatpush.xpose.msra.mxu0 %v367
        %447 = vmatpush.xpose.msra.mxu0 %v364
        %448 = vmatpush.xpose.msra.mxu0 %v361
        %449 = vmatpush.xpose.msra.mxu0 %v358
        %450 = vmatmul.f32.gmra.mxu0 %v298
        %v451 = vpop.f32.mrf.mxu0
        %v452 = vadd.f32 %v279, %v451
        %453 = vmatmul.f32.gmra.mxu0 %v301
        %v454 = vpop.f32.mrf.mxu0
        %v455 = vadd.f32 %v284, %v454
        %456 = vmatmul.f32.gmra.mxu0 %v304
        %v457 = vpop.f32.mrf.mxu0
        %v458 = vadd.f32 %v289, %v457
        %459 = vmatmul.f32.gmra.mxu0 %v307
        %v460 = vpop.f32.mrf.mxu0
        %v461 = vadd.f32 %v294, %v460
        %462 = vdwg.mxu0
        %v463 = vmul.f32 %v423, 0.01
        %v464 = vmul.f32 %v452, 0.01
        %v465 = vmul.f32 %v426, 0.01
        %v466 = vmul.f32 %v455, 0.01
        %v467 = vmul.f32 %v429, 0.01
        %v468 = vmul.f32 %v458, 0.01
        %v469 = vmul.f32 %v432, 0.01
        %v470 = vmul.f32 %v461, 0.01
        %v471 = vmax.f32 %v423, %v463
        %v472 = vmax.f32 %v452, %v464
        %v473 = vmax.f32 %v426, %v465
        %v474 = vmax.f32 %v455, %v466
        %v475 = vmax.f32 %v429, %v467
        %v476 = vmax.f32 %v458, %v468
        %v477 = vmax.f32 %v432, %v469
        %v478 = vmax.f32 %v461, %v470
        %v479 = vld [vmem:[%s3] sm:$0xff]
        %v480 = vld [vmem:[%s3 + $0x8] sm:$0xff]
        %v481 = vld [vmem:[%s3 + $0x10] sm:$0xff]
        %v482 = vld [vmem:[%s3 + $0x18] sm:$0xff]
        %v483 = vld [vmem:[%s4] sm:$0xff]
        %v484 = vld [vmem:[%s4 + $0x8] sm:$0xff]
        %v485 = vld [vmem:[%s4 + $0x10] sm:$0xff]
        %v486 = vld [vmem:[%s4 + $0x18] sm:$0xff]
        %488 = vset.pattern.permute.xlu0 0
        %489 = vperm.xlu0 %488, %v483
        %v490 = vpop.permute.xlu0 %489
        %493 = vset.pattern.permute.xlu0 0
        %494 = vperm.xlu0 %493, %v484
        %v495 = vpop.permute.xlu0 %494
        %498 = vset.pattern.permute.xlu0 0
        %499 = vperm.xlu0 %498, %v485
        %v500 = vpop.permute.xlu0 %499
        %503 = vset.pattern.permute.xlu0 0
        %504 = vperm.xlu0 %503, %v486
        %v505 = vpop.permute.xlu0 %504
        %vm507 = vcmask 261120
        %v509 = vsel %vm507, %v479, 0
        %v512 = vsel %vm507, %v480, 0
        %v515 = vsel %vm507, %v481, 0
        %v518 = vsel %vm507, %v482, 0
        %520 = vmatpush.msra.mxu0 0.0
        %521 = vmatpush.msra.mxu0 0.0
        %522 = vmatpush.msra.mxu0 0.0
        %523 = vmatpush.msra.mxu0 0.0
        %524 = vmatpush.msra.mxu0 0.0
        %525 = vmatpush.msra.mxu0 0.0
        %526 = vmatpush.msra.mxu0 0.0
        %527 = vmatpush.msra.mxu0 0.0
        %528 = vmatpush.msra.mxu0 0.0
        %529 = vmatpush.msra.mxu0 0.0
        %530 = vmatpush.msra.mxu0 0.0
        %531 = vmatpush.msra.mxu0 0.0
        %532 = vmatpush.msra.mxu0 %v477
        %533 = vmatpush.msra.mxu0 %v475
        %534 = vmatpush.msra.mxu0 %v473
        %535 = vmatpush.msra.mxu0 %v471
        %536 = vmatmul.f32.gmra.mxu0 %v509
        %v537 = vpop.f32.mrf.mxu0
        %v538 = vadd.f32 %v490, %v537
        %539 = vmatmul.f32.gmra.mxu0 %v512
        %v540 = vpop.f32.mrf.mxu0
        %v541 = vadd.f32 %v495, %v540
        %542 = vmatmul.f32.gmra.mxu0 %v515
        %v543 = vpop.f32.mrf.mxu0
        %v544 = vadd.f32 %v500, %v543
        %545 = vmatmul.f32.gmra.mxu0 %v518
        %v546 = vpop.f32.mrf.mxu0
        %v547 = vadd.f32 %v505, %v546
        %548 = vdwg.mxu0
        %549 = vmatpush.msra.mxu0 0.0
        %550 = vmatpush.msra.mxu0 0.0
        %551 = vmatpush.msra.mxu0 0.0
        %552 = vmatpush.msra.mxu0 0.0
        %553 = vmatpush.msra.mxu0 0.0
        %554 = vmatpush.msra.mxu0 0.0
        %555 = vmatpush.msra.mxu0 0.0
        %556 = vmatpush.msra.mxu0 0.0
        %557 = vmatpush.msra.mxu0 0.0
        %558 = vmatpush.msra.mxu0 0.0
        %559 = vmatpush.msra.mxu0 0.0
        %560 = vmatpush.msra.mxu0 0.0
        %561 = vmatpush.msra.mxu0 %v478
        %562 = vmatpush.msra.mxu0 %v476
        %563 = vmatpush.msra.mxu0 %v474
        %564 = vmatpush.msra.mxu0 %v472
        %565 = vmatmul.f32.gmra.mxu0 %v509
        %v566 = vpop.f32.mrf.mxu0
        %v567 = vadd.f32 %v490, %v566
        %568 = vmatmul.f32.gmra.mxu0 %v512
        %v569 = vpop.f32.mrf.mxu0
        %v570 = vadd.f32 %v495, %v569
        %571 = vmatmul.f32.gmra.mxu0 %v515
        %v572 = vpop.f32.mrf.mxu0
        %v573 = vadd.f32 %v500, %v572
        %574 = vmatmul.f32.gmra.mxu0 %v518
        %v575 = vpop.f32.mrf.mxu0
        %v576 = vadd.f32 %v505, %v575
        %577 = vdwg.mxu0
        %v578 = vmul.f32 %v538, 0.01
        %v579 = vmul.f32 %v567, 0.01
        %v580 = vmul.f32 %v541, 0.01
        %v581 = vmul.f32 %v570, 0.01
        %v582 = vmul.f32 %v544, 0.01
        %v583 = vmul.f32 %v573, 0.01
        %v584 = vmul.f32 %v547, 0.01
        %v585 = vmul.f32 %v576, 0.01
        %v586 = vmax.f32 %v538, %v578
        %v587 = vmax.f32 %v567, %v579
        %v588 = vmax.f32 %v541, %v580
        %v589 = vmax.f32 %v570, %v581
        %v590 = vmax.f32 %v544, %v582
        %v591 = vmax.f32 %v573, %v583
        %v592 = vmax.f32 %v547, %v584
        %v593 = vmax.f32 %v576, %v585
        %s594 = scalar_lea.vmem %s3, 32
        %v595 = vld [vmem:[%s594] sm:$0xff]
        %v596 = vld [vmem:[%s594 + $0x8] sm:$0xff]
        %v597 = vld [vmem:[%s594 + $0x10] sm:$0xff]
        %v598 = vld [vmem:[%s594 + $0x18] sm:$0xff]
        %s599 = scalar_lea.vmem %s4, 32
        %v600 = vld [vmem:[%s599] sm:$0xff]
        %v601 = vld [vmem:[%s599 + $0x8] sm:$0xff]
        %v602 = vld [vmem:[%s599 + $0x10] sm:$0xff]
        %v603 = vld [vmem:[%s599 + $0x18] sm:$0xff]
        %605 = vset.pattern.permute.xlu0 0
        %606 = vperm.xlu0 %605, %v600
        %v607 = vpop.permute.xlu0 %606
        %610 = vset.pattern.permute.xlu0 0
        %611 = vperm.xlu0 %610, %v601
        %v612 = vpop.permute.xlu0 %611
        %615 = vset.pattern.permute.xlu0 0
        %616 = vperm.xlu0 %615, %v602
        %v617 = vpop.permute.xlu0 %616
        %620 = vset.pattern.permute.xlu0 0
        %621 = vperm.xlu0 %620, %v603
        %v622 = vpop.permute.xlu0 %621
        %v625 = vsel %vm507, %v595, 0
        %v628 = vsel %vm507, %v596, 0
        %v631 = vsel %vm507, %v597, 0
        %v634 = vsel %vm507, %v598, 0
        %636 = vmatpush.msra.mxu0 0.0
        %637 = vmatpush.msra.mxu0 0.0
        %638 = vmatpush.msra.mxu0 0.0
        %639 = vmatpush.msra.mxu0 0.0
        %640 = vmatpush.msra.mxu0 0.0
        %641 = vmatpush.msra.mxu0 0.0
        %642 = vmatpush.msra.mxu0 0.0
        %643 = vmatpush.msra.mxu0 0.0
        %644 = vmatpush.msra.mxu0 0.0
        %645 = vmatpush.msra.mxu0 0.0
        %646 = vmatpush.msra.mxu0 0.0
        %647 = vmatpush.msra.mxu0 0.0
        %648 = vmatpush.msra.mxu0 %v592
        %649 = vmatpush.msra.mxu0 %v590
        %650 = vmatpush.msra.mxu0 %v588
        %651 = vmatpush.msra.mxu0 %v586
        %652 = vmatmul.f32.gmra.mxu0 %v625
        %v653 = vpop.f32.mrf.mxu0
        %v654 = vadd.f32 %v607, %v653
        %655 = vmatmul.f32.gmra.mxu0 %v628
        %v656 = vpop.f32.mrf.mxu0
        %v657 = vadd.f32 %v612, %v656
        %658 = vmatmul.f32.gmra.mxu0 %v631
        %v659 = vpop.f32.mrf.mxu0
        %v660 = vadd.f32 %v617, %v659
        %661 = vmatmul.f32.gmra.mxu0 %v634
        %v662 = vpop.f32.mrf.mxu0
        %v663 = vadd.f32 %v622, %v662
        %664 = vdwg.mxu0
        %665 = vmatpush.msra.mxu0 0.0
        %666 = vmatpush.msra.mxu0 0.0
        %667 = vmatpush.msra.mxu0 0.0
        %668 = vmatpush.msra.mxu0 0.0
        %669 = vmatpush.msra.mxu0 0.0
        %670 = vmatpush.msra.mxu0 0.0
        %671 = vmatpush.msra.mxu0 0.0
        %672 = vmatpush.msra.mxu0 0.0
        %673 = vmatpush.msra.mxu0 0.0
        %674 = vmatpush.msra.mxu0 0.0
        %675 = vmatpush.msra.mxu0 0.0
        %676 = vmatpush.msra.mxu0 0.0
        %677 = vmatpush.msra.mxu0 %v593
        %678 = vmatpush.msra.mxu0 %v591
        %679 = vmatpush.msra.mxu0 %v589
        %680 = vmatpush.msra.mxu0 %v587
        %681 = vmatmul.f32.gmra.mxu0 %v625
        %v682 = vpop.f32.mrf.mxu0
        %v683 = vadd.f32 %v607, %v682
        %684 = vmatmul.f32.gmra.mxu0 %v628
        %v685 = vpop.f32.mrf.mxu0
        %v686 = vadd.f32 %v612, %v685
        %687 = vmatmul.f32.gmra.mxu0 %v631
        %v688 = vpop.f32.mrf.mxu0
        %v689 = vadd.f32 %v617, %v688
        %690 = vmatmul.f32.gmra.mxu0 %v634
        %v691 = vpop.f32.mrf.mxu0
        %v692 = vadd.f32 %v622, %v691
        %693 = vdwg.mxu0
        %v694 = vmul.f32 %v654, 0.01
        %v695 = vmul.f32 %v683, 0.01
        %v696 = vmul.f32 %v657, 0.01
        %v697 = vmul.f32 %v686, 0.01
        %v698 = vmul.f32 %v660, 0.01
        %v699 = vmul.f32 %v689, 0.01
        %v700 = vmul.f32 %v663, 0.01
        %v701 = vmul.f32 %v692, 0.01
        %v702 = vmax.f32 %v654, %v694
        %v703 = vmax.f32 %v683, %v695
        %v704 = vmax.f32 %v657, %v696
        %v705 = vmax.f32 %v686, %v697
        %v706 = vmax.f32 %v660, %v698
        %v707 = vmax.f32 %v689, %v699
        %v708 = vmax.f32 %v663, %v700
        %v709 = vmax.f32 %v692, %v701
        %s710 = scalar_lea.vmem %s3, 64
        %v711 = vld [vmem:[%s710] sm:$0xff]
        %v712 = vld [vmem:[%s710 + $0x8] sm:$0xff]
        %v713 = vld [vmem:[%s710 + $0x10] sm:$0xff]
        %v714 = vld [vmem:[%s710 + $0x18] sm:$0xff]
        %s715 = scalar_lea.vmem %s4, 64
        %v716 = vld [vmem:[%s715] sm:$0xff]
        %v717 = vld [vmem:[%s715 + $0x8] sm:$0xff]
        %v718 = vld [vmem:[%s715 + $0x10] sm:$0xff]
        %v719 = vld [vmem:[%s715 + $0x18] sm:$0xff]
        %721 = vset.pattern.permute.xlu0 0
        %722 = vperm.xlu0 %721, %v716
        %v723 = vpop.permute.xlu0 %722
        %726 = vset.pattern.permute.xlu0 0
        %727 = vperm.xlu0 %726, %v717
        %v728 = vpop.permute.xlu0 %727
        %731 = vset.pattern.permute.xlu0 0
        %732 = vperm.xlu0 %731, %v718
        %v733 = vpop.permute.xlu0 %732
        %736 = vset.pattern.permute.xlu0 0
        %737 = vperm.xlu0 %736, %v719
        %v738 = vpop.permute.xlu0 %737
        %v741 = vsel %vm507, %v711, 0
        %v744 = vsel %vm507, %v712, 0
        %v747 = vsel %vm507, %v713, 0
        %v750 = vsel %vm507, %v714, 0
        %752 = vmatpush.msra.mxu0 0.0
        %753 = vmatpush.msra.mxu0 0.0
        %754 = vmatpush.msra.mxu0 0.0
        %755 = vmatpush.msra.mxu0 0.0
        %756 = vmatpush.msra.mxu0 0.0
        %757 = vmatpush.msra.mxu0 0.0
        %758 = vmatpush.msra.mxu0 0.0
        %759 = vmatpush.msra.mxu0 0.0
        %760 = vmatpush.msra.mxu0 0.0
        %761 = vmatpush.msra.mxu0 0.0
        %762 = vmatpush.msra.mxu0 0.0
        %763 = vmatpush.msra.mxu0 0.0
        %764 = vmatpush.msra.mxu0 %v708
        %765 = vmatpush.msra.mxu0 %v706
        %766 = vmatpush.msra.mxu0 %v704
        %767 = vmatpush.msra.mxu0 %v702
        %768 = vmatmul.f32.gmra.mxu0 %v741
        %v769 = vpop.f32.mrf.mxu0
        %v770 = vadd.f32 %v723, %v769
        %771 = vmatmul.f32.gmra.mxu0 %v744
        %v772 = vpop.f32.mrf.mxu0
        %v773 = vadd.f32 %v728, %v772
        %774 = vmatmul.f32.gmra.mxu0 %v747
        %v775 = vpop.f32.mrf.mxu0
        %v776 = vadd.f32 %v733, %v775
        %777 = vmatmul.f32.gmra.mxu0 %v750
        %v778 = vpop.f32.mrf.mxu0
        %v779 = vadd.f32 %v738, %v778
        %780 = vdwg.mxu0
        %781 = vmatpush.msra.mxu0 0.0
        %782 = vmatpush.msra.mxu0 0.0
        %783 = vmatpush.msra.mxu0 0.0
        %784 = vmatpush.msra.mxu0 0.0
        %785 = vmatpush.msra.mxu0 0.0
        %786 = vmatpush.msra.mxu0 0.0
        %787 = vmatpush.msra.mxu0 0.0
        %788 = vmatpush.msra.mxu0 0.0
        %789 = vmatpush.msra.mxu0 0.0
        %790 = vmatpush.msra.mxu0 0.0
        %791 = vmatpush.msra.mxu0 0.0
        %792 = vmatpush.msra.mxu0 0.0
        %793 = vmatpush.msra.mxu0 %v709
        %794 = vmatpush.msra.mxu0 %v707
        %795 = vmatpush.msra.mxu0 %v705
        %796 = vmatpush.msra.mxu0 %v703
        %797 = vmatmul.f32.gmra.mxu0 %v741
        %v798 = vpop.f32.mrf.mxu0
        %v799 = vadd.f32 %v723, %v798
        %800 = vmatmul.f32.gmra.mxu0 %v744
        %v801 = vpop.f32.mrf.mxu0
        %v802 = vadd.f32 %v728, %v801
        %803 = vmatmul.f32.gmra.mxu0 %v747
        %v804 = vpop.f32.mrf.mxu0
        %v805 = vadd.f32 %v733, %v804
        %806 = vmatmul.f32.gmra.mxu0 %v750
        %v807 = vpop.f32.mrf.mxu0
        %v808 = vadd.f32 %v738, %v807
        %809 = vdwg.mxu0
        %v810 = vmul.f32 %v770, 0.01
        %v811 = vmul.f32 %v799, 0.01
        %v812 = vmul.f32 %v773, 0.01
        %v813 = vmul.f32 %v802, 0.01
        %v814 = vmul.f32 %v776, 0.01
        %v815 = vmul.f32 %v805, 0.01
        %v816 = vmul.f32 %v779, 0.01
        %v817 = vmul.f32 %v808, 0.01
        %v818 = vmax.f32 %v770, %v810
        %v819 = vmax.f32 %v799, %v811
        %v820 = vmax.f32 %v773, %v812
        %v821 = vmax.f32 %v802, %v813
        %v822 = vmax.f32 %v776, %v814
        %v823 = vmax.f32 %v805, %v815
        %v824 = vmax.f32 %v779, %v816
        %v825 = vmax.f32 %v808, %v817
        %s826 = scalar_lea.vmem %s3, 96
        %v827 = vld [vmem:[%s826] sm:$0xff]
        %v828 = vld [vmem:[%s826 + $0x8] sm:$0xff]
        %v829 = vld [vmem:[%s826 + $0x10] sm:$0xff]
        %v830 = vld [vmem:[%s826 + $0x18] sm:$0xff]
        %s831 = scalar_lea.vmem %s4, 96
        %v832 = vld [vmem:[%s831] sm:$0xff]
        %v833 = vld [vmem:[%s831 + $0x8] sm:$0xff]
        %v834 = vld [vmem:[%s831 + $0x10] sm:$0xff]
        %v835 = vld [vmem:[%s831 + $0x18] sm:$0xff]
        %837 = vset.pattern.permute.xlu0 0
        %838 = vperm.xlu0 %837, %v832
        %v839 = vpop.permute.xlu0 %838
        %842 = vset.pattern.permute.xlu0 0
        %843 = vperm.xlu0 %842, %v833
        %v844 = vpop.permute.xlu0 %843
        %846 = vset.pattern.permute.xlu0 0
        %847 = vperm.xlu0 %846, %v834
        %v848 = vpop.permute.xlu0 %847
        %850 = vset.pattern.permute.xlu0 0
        %851 = vperm.xlu0 %850, %v835
        %v852 = vpop.permute.xlu0 %851
        %v854 = vsel %vm507, %v827, 0
        %v857 = vsel %vm507, %v828, 0
        %v860 = vsel %vm507, %v829, 0
        %v863 = vsel %vm507, %v830, 0
        %865 = vmatpush.msra.mxu0 0.0
        %866 = vmatpush.msra.mxu0 0.0
        %867 = vmatpush.msra.mxu0 0.0
        %868 = vmatpush.msra.mxu0 0.0
        %869 = vmatpush.msra.mxu0 0.0
        %870 = vmatpush.msra.mxu0 0.0
        %871 = vmatpush.msra.mxu0 0.0
        %872 = vmatpush.msra.mxu0 0.0
        %873 = vmatpush.msra.mxu0 0.0
        %874 = vmatpush.msra.mxu0 0.0
        %875 = vmatpush.msra.mxu0 0.0
        %876 = vmatpush.msra.mxu0 0.0
        %877 = vmatpush.msra.mxu0 %v824
        %878 = vmatpush.msra.mxu0 %v822
        %879 = vmatpush.msra.mxu0 %v820
        %880 = vmatpush.msra.mxu0 %v818
        %881 = vmatmul.f32.gmra.mxu0 %v854
        %v882 = vpop.f32.mrf.mxu0
        %v883 = vadd.f32 %v839, %v882
        %884 = vmatmul.f32.gmra.mxu0 %v857
        %v885 = vpop.f32.mrf.mxu0
        %886 = vmatmul.f32.gmra.mxu0 %v860
        %v887 = vpop.f32.mrf.mxu0
        %888 = vmatmul.f32.gmra.mxu0 %v863
        %v889 = vpop.f32.mrf.mxu0
        %890 = vdwg.mxu0
        %891 = vmatpush.msra.mxu0 0.0
        %892 = vmatpush.msra.mxu0 0.0
        %893 = vmatpush.msra.mxu0 0.0
        %894 = vmatpush.msra.mxu0 0.0
        %895 = vmatpush.msra.mxu0 0.0
        %896 = vmatpush.msra.mxu0 0.0
        %897 = vmatpush.msra.mxu0 0.0
        %898 = vmatpush.msra.mxu0 0.0
        %899 = vmatpush.msra.mxu0 0.0
        %900 = vmatpush.msra.mxu0 0.0
        %901 = vmatpush.msra.mxu0 0.0
        %902 = vmatpush.msra.mxu0 0.0
        %903 = vmatpush.msra.mxu0 %v825
        %904 = vmatpush.msra.mxu0 %v823
        %905 = vmatpush.msra.mxu0 %v821
        %906 = vmatpush.msra.mxu0 %v819
        %907 = vmatmul.f32.gmra.mxu0 %v854
        %v908 = vpop.f32.mrf.mxu0
        %v909 = vadd.f32 %v839, %v908
        %910 = vmatmul.f32.gmra.mxu0 %v857
        %v911 = vpop.f32.mrf.mxu0
        %912 = vmatmul.f32.gmra.mxu0 %v860
        %v913 = vpop.f32.mrf.mxu0
        %914 = vmatmul.f32.gmra.mxu0 %v863
        %v915 = vpop.f32.mrf.mxu0
        %916 = vdwg.mxu0
        %v919 = vrot.slane %v799, 7
        %vm920 = vcmask 1040384
        %v921 = vsel %vm920, %v770, %v919
        %s923 = sshra.s32 %s242, 7
        %s924 = sand.u32 %s242, 127
        %s925 = smul.addr %s923, 4
        %s926 = scalar_lea.vmem %s226, %s925
        %v927 = vlaneseq
        %vm928 = vcmp.ge.s32.totalorder %v927, 0
        %vm929 = vcmp.lt.s32.totalorder %v927, 256
        %vm930 = vmand %vm928, %vm929
        %931 = vst.msk [vmem:[%s926] ss:$4 sm:$0x3] %vm930, %v921
        %v934 = vrot.slane %v909, 4
        %vm935 = vcmask 1043456
        %v936 = vsel %vm935, %v883, %v934
        %v937 = vrot.slane %v936, 7
        %939 = vst [vmem:[%s926] sm:$0xee] %v937
      $region45: #{vanilla_mlp_rgba.1} parent=39 // loop_footer
        %s241 = sadd.s32 1, %s237
      $region46: #{vanilla_mlp_rgba.1} parent=39 // loop_footer_branch
        %236 = sbr.rel target = $region42
      $region47: #{vanilla_mlp_rgba.1} parent=39 // loop_exit
        _
      %s940 = smul.u32 12, %s16
      %p941 = scmp.lt.s32.totalorder %s940, 23
      %s942 = scalar_select %p941, %s940, 23
      %s943 = smul.addr %s942, 4
      %s944 = scalar_lea.vmem %s5, %s943
      // Predicated region
      $region48: #{vanilla_mlp_rgba.1} parent=39 // pred_check
        %p945 = pneg %p144
      $region49: #{vanilla_mlp_rgba.1} parent=39 // pred_check_branch
        %947 = sbr.rel (%p945) target = $region51
      $region50: #{vanilla_mlp_rgba.1} parent=39 // pred_region
        %s948 = smul.u32 12, %s16
      $region51: #{vanilla_mlp_rgba.1} parent=39 // pred_fallthru
        _
    $region40: #{vanilla_mlp_rgba.1} parent=5 // pred_fallthru
      _
    %p949 = scmp.le.s32.totalorder 2, %s11
    // Predicated region
    $region52: #{vanilla_mlp_rgba.1} parent=5 // pred_check
      %p950 = pneg %p949
    $region53: #{vanilla_mlp_rgba.1} parent=5 // pred_check_branch
      %952 = sbr.rel (%p950) target = $region55
    $region54: #{vanilla_mlp_rgba.1} parent=5 // pred_region
      %s953 = ssub.s32 %s11, 2
      // Predicated region
      $region56: #{vanilla_mlp_rgba.1} parent=54 // pred_check
        %p954 = pneg %p150
      $region57: #{vanilla_mlp_rgba.1} parent=54 // pred_check_branch
        %956 = sbr.rel (%p954) target = $region59
      $region58: #{vanilla_mlp_rgba.1} parent=54 // pred_region
        %s957 = smul.u32 12, %s17
        %p958 = scmp.lt.s32.totalorder %s957, 23
        %s959 = scalar_select %p958, %s957, 23
        %s960 = smul.addr %s959, 4
        %s961 = scalar_lea.vmem %s5, %s960
      $region59: #{vanilla_mlp_rgba.1} parent=54 // pred_fallthru
        _
    $region55: #{vanilla_mlp_rgba.1} parent=5 // pred_fallthru
      _
  $region6: #{vanilla_mlp_rgba.1} parent=0 // loop_footer
    %s15 = sadd.s32 1, %s11
  $region7: #{vanilla_mlp_rgba.1} parent=0 // loop_footer_branch
    %10 = sbr.rel target = $region3
  $region8: #{vanilla_mlp_rgba.1} parent=0 // loop_exit
    _

</llo_original>
